<compile_context>
chip_gen: v7x
topology: tpu7x:2x2x1
jax: 0.10.0
libtpu: 0.0.40
codegen_flags: <defaults>
</compile_context>

<pallas_src>
import jax
import jax.numpy as jnp
from jax.experimental import pallas as pl
from jax.experimental.pallas import tpu as pltpu


def additive_attention_kernel(enc_ref, dec_ref, w_enc_ref, w_dec_ref, w_attn_ref,
                              awe_ref, alpha_ref):
    bb, L = alpha_ref.shape
    A = w_enc_ref.shape[1]

    # h_j for every (batch, position) row of this block in ONE MXU matmul:
    # (bb*L, E) @ (E, A), f32 accumulation regardless of input dtype.
    h_j2d = jnp.dot(enc_ref[...], w_enc_ref[...],
                    preferred_element_type=jnp.float32)          # (bb*L, A) f32
    # Free sublane split: f32 and L % 8 == 0 (asserted in the wrapper).
    h_j = h_j2d.reshape(bb, L, A)                                 # (bb, L, A)

    # s_i for every batch row in one matmul: (bb, D) @ (D, A).
    s_i = jnp.dot(dec_ref[...], w_dec_ref[...],
                  preferred_element_type=jnp.float32)             # (bb, A) f32

    # tanh stays f32 (VPU/EUP path; bf16 here would only add casts on v5e).
    t = jnp.tanh(h_j + s_i[:, None, :])                           # (bb, L, A)

    # attn_linear with out_features=1: VPU multiply + XLU lane reduction
    # instead of a 1-column MXU matmul.  The bias is a constant added before a
    # softmax over L -> cancels exactly, so it is dropped entirely.
    energy = jnp.sum(t * w_attn_ref[...], axis=-1)                # (bb, L)

    # Softmax over the sequence axis (torch dim=1) = lane axis here.
    m = jnp.max(energy, axis=-1, keepdims=True)                   # (bb, 1)
    e = jnp.exp(energy - m)                                       # (bb, L)
    denom = jnp.sum(e, axis=-1, keepdims=True)                    # (bb, 1)
    inv = 1.0 / denom                                             # exact, only (bb,1) elems
    alpha = e * inv                                               # (bb, L)

    alpha_ref[...] = alpha.astype(alpha_ref.dtype)
    # alpha needs L on sublanes for the awe multiply: one small XLU relayout.
    awe = alpha[:, :, None] * h_j                                 # (bb, L, A) f32
    awe_ref[...] = awe.reshape(bb * L, A).astype(awe_ref.dtype)   # dense 2D store


def _pick_batch_block(B, L, E, A, D, in_itemsize, out_itemsize, vmem_budget_bytes):
    """Heuristic batch_block:
       * tiny calls -> one fused block (grid-step/launch overhead dominates),
       * non-trivial calls -> >= 4 blocks (pipeline overlap; parallel grid axis
         also shards across v7x's two TensorCores),
       * always small enough that the double-buffered blocks fit the VMEM budget,
       * batch_block == B or a multiple of 8 so (bb, D)/(bb, L) blocks are legal."""
    per_row_in = L * E * in_itemsize + D * in_itemsize
    per_row_out = L * (A + 1) * out_itemsize
    per_row = 2 * (per_row_in + per_row_out)          # double-buffered in + out
    weight_bytes = (E * A + D * A) * in_itemsize + A * 4
    usable = max(vmem_budget_bytes - 2 * weight_bytes, per_row)
    bb_vmem = max(1, usable // per_row)

    total_bytes = B * (per_row_in + per_row_out)
    target_blocks = 1 if total_bytes < (1 << 20) else 4
    bb = int(min(B, bb_vmem, max(1, B // target_blocks)))
    if bb < B:
        bb = (bb // 8) * 8
        while bb >= 8 and B % bb:
            bb -= 8
        if bb < 8:
            bb = B            # no legal multiple-of-8 divisor: single fused block
    return int(bb)


def additive_attention(encoder_out, decoder_hidden, w_enc, w_dec, w_attn, b_attn=None,
                       *, batch_block=None, matmul_dtype=None,
                       single_buffer_weights=True,
                       vmem_budget_bytes=40 * 1024 * 1024):
    """encoder_out: (B, L, E); decoder_hidden: (1, B, D).
       Weights are the transposed nn.Linear weights: w_enc (E,A), w_dec (D,A),
       w_attn (A,1). b_attn is accepted for API parity but unused (it cancels
       in the softmax and energy is never returned)."""
    B, L, E = encoder_out.shape
    dec = decoder_hidden[0]                      # squeeze(0) -> (B, D)
    D = dec.shape[-1]
    A = w_enc.shape[-1]
    out_dtype = encoder_out.dtype
    del b_attn                                   # constant offset before softmax cancels

    # TODO(synk): support L not a multiple of 8 via padding + masked softmax.
    assert L % 8 == 0, "L must be a multiple of 8 so the (B*L, E) view is relayout-free"

    if matmul_dtype is not None:
        # bf16 inputs: MXU-native on v6e/v7x (accepted on v5e) and halves the
        # dominant encoder_out HBM traffic; accumulation stays f32 in-kernel.
        encoder_out = encoder_out.astype(matmul_dtype)
        dec = dec.astype(matmul_dtype)
        w_enc = w_enc.astype(matmul_dtype)
        w_dec = w_dec.astype(matmul_dtype)

    in_itemsize = jnp.dtype(encoder_out.dtype).itemsize
    out_itemsize = jnp.dtype(out_dtype).itemsize

    if batch_block is None:
        batch_block = _pick_batch_block(B, L, E, A, D, in_itemsize, out_itemsize,
                                        vmem_budget_bytes)
    assert B % batch_block == 0, "batch must be divisible by batch_block"
    assert batch_block == B or batch_block % 8 == 0, \
        "batch_block must equal B or be a multiple of 8 (second-minor block dims)"
    n_blocks = B // batch_block

    # Flatten encoder to a (B*L, E) slab outside the kernel (free XLA reshape):
    # the per-step block is then a dense (batch_block*L, E) row slab.
    enc2d = encoder_out.reshape(B * L, E)
    w_attn_row = w_attn.reshape(1, A).astype(jnp.float32)   # stays on the VPU path

    # Weights never change across grid steps: single-buffer them when the grid
    # actually iterates, so they don't waste 2x VMEM inside the pipeline.
    w_mode = pl.Buffered(1) if (single_buffer_weights and n_blocks > 1) else None

    # Explicit VMEM budget (sized for v7x's 64 MiB; generous headroom).
    block_bytes = (batch_block * L * E * in_itemsize
                   + batch_block * D * in_itemsize
                   + batch_block * L * A * out_itemsize
                   + batch_block * L * out_itemsize)
    weight_bytes = (E * A + D * A) * in_itemsize + A * 4
    n_wbufs = 1 if (single_buffer_weights and n_blocks > 1) else 2
    vmem_estimate = 2 * block_bytes + n_wbufs * weight_bytes
    vmem_limit = int(min(60 * 1024 * 1024, max(32 * 1024 * 1024, 2 * vmem_estimate)))

    awe2d, alpha = pl.pallas_call(
        additive_attention_kernel,
        out_shape=(
            jax.ShapeDtypeStruct((B * L, A), out_dtype),
            jax.ShapeDtypeStruct((B, L), out_dtype),
        ),
        grid_spec=pltpu.PrefetchScalarGridSpec(
            num_scalar_prefetch=0,
            grid=(n_blocks,),
            in_specs=[
                pl.BlockSpec((batch_block * L, E), lambda b: (b, 0)),   # encoder (2D slab)
                pl.BlockSpec((batch_block, D), lambda b: (b, 0)),       # decoder (squeezed)
                pl.BlockSpec((E, A), lambda b: (0, 0), pipeline_mode=w_mode),  # W_enc
                pl.BlockSpec((D, A), lambda b: (0, 0), pipeline_mode=w_mode),  # W_dec
                pl.BlockSpec((1, A), lambda b: (0, 0), pipeline_mode=w_mode),  # w_attn row
            ],
            out_specs=[
                pl.BlockSpec((batch_block * L, A), lambda b: (b, 0)),   # awe (dense slab)
                pl.BlockSpec((batch_block, L), lambda b: (b, 0)),       # alpha
            ],
        ),
        compiler_params=pltpu.CompilerParams(
            dimension_semantics=("parallel",),       # shards grid across v7x's 2 TCs
            vmem_limit_bytes=vmem_limit,
        ),
    )(enc2d, dec, w_enc, w_dec, w_attn_row)

    return awe2d.reshape(B, L, A), alpha


def reference(encoder_out, decoder_hidden, w_enc, w_dec, w_attn, b_attn):
    h_j = encoder_out @ w_enc                                   # (B, L, A)
    s_i = (decoder_hidden @ w_dec)[0]                           # (B, A)
    energy = (jnp.tanh(h_j + s_i[:, None, :]) @ w_attn)[..., 0] + b_attn[0]
    alpha = jax.nn.softmax(energy, axis=1)
    return alpha[..., None] * h_j, alpha


if __name__ == "__main__":
    key = jax.random.PRNGKey(0)
    k = jax.random.split(key, 8)

    # Module-consistent small shapes.
    B, L = 2, 8
    encoder_dim, decoder_dim, attention_dim = 32, 48, 32

    encoder_out = jax.random.normal(k[0], (B, L, encoder_dim), jnp.float32)
    decoder_hidden = jax.random.normal(k[1], (1, B, decoder_dim), jnp.float32)
    # PyTorch stores Linear weight as (out, in); keep transposed (in, out) layout.
    w_enc = jax.random.normal(k[2], (encoder_dim, attention_dim), jnp.float32) * 0.1
    w_dec = jax.random.normal(k[3], (decoder_dim, attention_dim), jnp.float32) * 0.1
    w_attn = jax.random.normal(k[4], (attention_dim, 1), jnp.float32) * 0.1
    b_attn = jax.random.normal(k[5], (1,), jnp.float32) * 0.1

    awe_ref, alpha_ref = reference(encoder_out, decoder_hidden, w_enc, w_dec, w_attn, b_attn)

    # 1) f32 path, single fused block (tiny call -> launch-bound; one grid step).
    awe, alpha = additive_attention(encoder_out, decoder_hidden, w_enc, w_dec, w_attn, b_attn)
    jax.block_until_ready((awe, alpha))
    assert awe.shape == (B, L, attention_dim) and alpha.shape == (B, L)
    assert jnp.allclose(awe, awe_ref, atol=1e-4, rtol=1e-4)
    assert jnp.allclose(alpha, alpha_ref, atol=1e-4, rtol=1e-4)

    # 2) bf16 MXU path (v6e/v7x-native matmuls, f32 accumulation + f32 softmax).
    awe_bf, alpha_bf = additive_attention(encoder_out, decoder_hidden, w_enc, w_dec,
                                          w_attn, b_attn, matmul_dtype=jnp.bfloat16)
    jax.block_until_ready((awe_bf, alpha_bf))
    assert jnp.allclose(awe_bf, awe_ref, atol=5e-2, rtol=5e-2)
    assert jnp.allclose(alpha_bf, alpha_ref, atol=5e-2, rtol=5e-2)

    # 3) Multi-block pipelined / megacore path with single-buffered weights.
    B2 = 16
    encoder_out2 = jax.random.normal(k[6], (B2, L, encoder_dim), jnp.float32)
    decoder_hidden2 = jax.random.normal(k[7], (1, B2, decoder_dim), jnp.float32)
    awe2, alpha2 = additive_attention(encoder_out2, decoder_hidden2, w_enc, w_dec,
                                      w_attn, b_attn, batch_block=8)
    jax.block_until_ready((awe2, alpha2))
    awe2_ref, alpha2_ref = reference(encoder_out2, decoder_hidden2, w_enc, w_dec,
                                     w_attn, b_attn)
    assert jnp.allclose(awe2, awe2_ref, atol=1e-4, rtol=1e-4)
    assert jnp.allclose(alpha2, alpha2_ref, atol=1e-4, rtol=1e-4)

    print("KERNEL_OK")
</pallas_src>

<mosaic_0001>
module attributes {stable_mosaic.version = 11 : i64} {
  func.func @additive_attention_kernel(%arg0: i32, %arg1: memref<16x32xf32, #tpu.memory_space<vmem>>, %arg2: memref<2x48xf32, #tpu.memory_space<vmem>>, %arg3: memref<32x32xf32, #tpu.memory_space<vmem>>, %arg4: memref<48x32xf32, #tpu.memory_space<vmem>>, %arg5: memref<1x32xf32, #tpu.memory_space<vmem>>, %arg6: memref<16x32xf32, #tpu.memory_space<vmem>>, %arg7: memref<2x8xf32, #tpu.memory_space<vmem>>) attributes {dimension_semantics = [#tpu.dimension_semantics<parallel>], iteration_bounds = array<i64: 1>, scalar_prefetch = 0 : i64, scratch_operands = 0 : i64, tpu.core_type = #tpu.core_type<tc>, window_params = [{transform_indices = @transform_0, window_bounds = array<i64: 16, 32>}, {transform_indices = @transform_1, window_bounds = array<i64: 2, 48>}, {pipeline_mode = #tpu.pipeline_mode<synchronous>, transform_indices = @transform_2, window_bounds = array<i64: 32, 32>}, {pipeline_mode = #tpu.pipeline_mode<synchronous>, transform_indices = @transform_3, window_bounds = array<i64: 48, 32>}, {pipeline_mode = #tpu.pipeline_mode<synchronous>, transform_indices = @transform_4, window_bounds = array<i64: 1, 32>}, {transform_indices = @transform_5, window_bounds = array<i64: 16, 32>}, {transform_indices = @transform_6, window_bounds = array<i64: 2, 8>}]} {
    %c0 = arith.constant 0 : index
    %c0_0 = arith.constant 0 : index
    %0 = vector.load %arg1[%c0, %c0_0] : memref<16x32xf32, #tpu.memory_space<vmem>>, vector<16x32xf32>
    %c0_1 = arith.constant 0 : index
    %c0_2 = arith.constant 0 : index
    %1 = vector.load %arg3[%c0_1, %c0_2] : memref<32x32xf32, #tpu.memory_space<vmem>>, vector<32x32xf32>
    %cst = arith.constant dense<0.000000e+00> : vector<16x32xf32>
    %2 = tpu.matmul %0, %1, %cst {dimension_numbers = #tpu.dot_dimension_numbers<[1], [0], [0], [1], [0, 0, 1, 1], [], []>} : vector<16x32xf32>, vector<32x32xf32>, vector<16x32xf32> -> vector<16x32xf32>
    %3 = vector.shape_cast %2 : vector<16x32xf32> to vector<2x8x32xf32>
    %c0_3 = arith.constant 0 : index
    %c0_4 = arith.constant 0 : index
    %4 = vector.load %arg2[%c0_3, %c0_4] : memref<2x48xf32, #tpu.memory_space<vmem>>, vector<2x48xf32>
    %c0_5 = arith.constant 0 : index
    %c0_6 = arith.constant 0 : index
    %5 = vector.load %arg4[%c0_5, %c0_6] : memref<48x32xf32, #tpu.memory_space<vmem>>, vector<48x32xf32>
    %cst_7 = arith.constant dense<0.000000e+00> : vector<2x32xf32>
    %6 = tpu.matmul %4, %5, %cst_7 {dimension_numbers = #tpu.dot_dimension_numbers<[1], [0], [0], [1], [0, 0, 1, 1], [], []>} : vector<2x48xf32>, vector<48x32xf32>, vector<2x32xf32> -> vector<2x32xf32>
    %7 = vector.shape_cast %6 : vector<2x32xf32> to vector<2x1x32xf32>
    %8 = vector.broadcast %7 : vector<2x1x32xf32> to vector<2x8x32xf32>
    %9 = arith.addf %3, %8 : vector<2x8x32xf32>
    %10 = math.tanh %9 : vector<2x8x32xf32>
    %c0_8 = arith.constant 0 : index
    %c0_9 = arith.constant 0 : index
    %11 = vector.load %arg5[%c0_8, %c0_9] : memref<1x32xf32, #tpu.memory_space<vmem>>, vector<1x32xf32>
    %12 = vector.shape_cast %11 : vector<1x32xf32> to vector<1x1x32xf32>
    %13 = vector.broadcast %12 : vector<1x1x32xf32> to vector<2x8x32xf32>
    %14 = arith.mulf %10, %13 : vector<2x8x32xf32>
    %cst_10 = arith.constant dense<0.000000e+00> : vector<2x8xf32>
    %15 = vector.multi_reduction <add>, %14, %cst_10 [2] : vector<2x8x32xf32> to vector<2x8xf32>
    %cst_11 = arith.constant dense<0xFF800000> : vector<2xf32>
    %16 = vector.multi_reduction <maximumf>, %15, %cst_11 [1] : vector<2x8xf32> to vector<2xf32>
    %17 = vector.shape_cast %16 : vector<2xf32> to vector<2x1xf32>
    %18 = vector.broadcast %17 : vector<2x1xf32> to vector<2x8xf32>
    %19 = arith.subf %15, %18 : vector<2x8xf32>
    %20 = math.exp %19 : vector<2x8xf32>
    %cst_12 = arith.constant dense<0.000000e+00> : vector<2xf32>
    %21 = vector.multi_reduction <add>, %20, %cst_12 [1] : vector<2x8xf32> to vector<2xf32>
    %22 = vector.shape_cast %21 : vector<2xf32> to vector<2x1xf32>
    %cst_13 = arith.constant 1.000000e+00 : f32
    %23 = vector.broadcast %cst_13 : f32 to vector<2x1xf32>
    %24 = arith.divf %23, %22 : vector<2x1xf32>
    %25 = vector.broadcast %24 : vector<2x1xf32> to vector<2x8xf32>
    %26 = arith.mulf %20, %25 : vector<2x8xf32>
    %c0_14 = arith.constant 0 : index
    %c0_15 = arith.constant 0 : index
    %27 = vector.load %arg7[%c0_14, %c0_15] : memref<2x8xf32, #tpu.memory_space<vmem>>, vector<2x8xf32>
    tpu.vector_store %arg7[%c0_14, %c0_15], %26 {strides = array<i32>} : memref<2x8xf32, #tpu.memory_space<vmem>>, vector<2x8xf32>,
    %28 = vector.shape_cast %26 : vector<2x8xf32> to vector<2x8x1xf32>
    %29 = vector.broadcast %28 : vector<2x8x1xf32> to vector<2x8x32xf32>
    %30 = arith.mulf %29, %3 : vector<2x8x32xf32>
    %31 = vector.shape_cast %30 : vector<2x8x32xf32> to vector<16x32xf32>
    %c0_16 = arith.constant 0 : index
    %c0_17 = arith.constant 0 : index
    %32 = vector.load %arg6[%c0_16, %c0_17] : memref<16x32xf32, #tpu.memory_space<vmem>>, vector<16x32xf32>
    tpu.vector_store %arg6[%c0_16, %c0_17], %31 {strides = array<i32>} : memref<16x32xf32, #tpu.memory_space<vmem>>, vector<16x32xf32>,
    return
  }
  func.func @transform_0(%arg0: i32) -> (i32, i32) {
    %c0_i32 = arith.constant 0 : i32
    %c0_i32_0 = arith.constant 0 : i32
    return %arg0, %c0_i32 : i32, i32
  }
  func.func @transform_1(%arg0: i32) -> (i32, i32) {
    %c0_i32 = arith.constant 0 : i32
    %c0_i32_0 = arith.constant 0 : i32
    return %arg0, %c0_i32 : i32, i32
  }
  func.func @transform_2(%arg0: i32) -> (i32, i32) {
    %c0_i32 = arith.constant 0 : i32
    %c0_i32_0 = arith.constant 0 : i32
    %c0_i32_1 = arith.constant 0 : i32
    return %c0_i32, %c0_i32_0 : i32, i32
  }
  func.func @transform_3(%arg0: i32) -> (i32, i32) {
    %c0_i32 = arith.constant 0 : i32
    %c0_i32_0 = arith.constant 0 : i32
    %c0_i32_1 = arith.constant 0 : i32
    return %c0_i32, %c0_i32_0 : i32, i32
  }
  func.func @transform_4(%arg0: i32) -> (i32, i32) {
    %c0_i32 = arith.constant 0 : i32
    %c0_i32_0 = arith.constant 0 : i32
    %c0_i32_1 = arith.constant 0 : i32
    return %c0_i32, %c0_i32_0 : i32, i32
  }
  func.func @transform_5(%arg0: i32) -> (i32, i32) {
    %c0_i32 = arith.constant 0 : i32
    %c0_i32_0 = arith.constant 0 : i32
    return %arg0, %c0_i32 : i32, i32
  }
  func.func @transform_6(%arg0: i32) -> (i32, i32) {
    %c0_i32 = arith.constant 0 : i32
    %c0_i32_0 = arith.constant 0 : i32
    return %arg0, %c0_i32 : i32, i32
  }
}

</mosaic_0001>

<llo_original>
// kernel: tpu_custom_call.1
$region0: #{tpu_custom_call.1}
  #allocation0 [shape = 'u32[]', space=smem, size = 0x4, offset = 0x4, fixed_abs, tag = 'smem constant byte address 0x4 - core index']
  #allocation1 [shape = 'u32[144,128]{1,0:T(1,128)}', space=vmem, size = 0x12000, scoped, tag = 'internal scratch']
  %s0 = inlined_call_operand.vmem [shape: f32[16,32], index: 0, kind: input, shape index: {}]
  %s1 = inlined_call_operand.vmem [shape: f32[2,48], index: 1, kind: input, shape index: {}]
  %s2 = inlined_call_operand.vmem [shape: f32[32,32], index: 2, kind: input, shape index: {}]
  %s3 = inlined_call_operand.vmem [shape: f32[48,32], index: 3, kind: input, shape index: {}]
  %s4 = inlined_call_operand.vmem [shape: f32[1,32], index: 4, kind: input, shape index: {}]
  %s5 = inlined_call_operand.hbm [shape: f32[16,32], index: 5, kind: output, shape index: {0}]
  %s6 = inlined_call_operand.hbm [shape: f32[2,8], index: 6, kind: output, shape index: {1}]
  %7 = xla_tuple %s5, %s6
  %s8 = sld [smem:[#allocation0]]
  $region38: #{tpu_custom_call.1} parent=0
    _
  %s10 = ssub.s32 1, %s8
  %s11 = scalar_select 0, %s10, %s8
  $region1: #{tpu_custom_call.1} parent=0
    #allocation2 [shape = 'u8[8192]{0}', space=vmem, size = 0x2000, scoped, tag = 'output window, operand 0, single buffered']
    #allocation3 [shape = 's32[1]{0}', space=sflag, size = 0x4, scoped, tag = 'scoped memory for tpu_custom_call.1']
    #allocation4 [shape = 'u8[1024]{0}', space=vmem, size = 0x400, scoped, tag = 'output window, operand 1, single buffered']
    #allocation5 [shape = 's32[1]{0}', space=sflag, size = 0x4, scoped, tag = 'scoped memory for tpu_custom_call.1']
    %12 = vsyncpa [#allocation3], 0
    %13 = vsyncpa [#allocation5], 0
    // Predicated region
    $region2: #{tpu_custom_call.1} parent=1 // pred_check
      _
    $region3: #{tpu_custom_call.1} parent=1 // pred_check_branch
      %15 = sbr.rel (0) target = $region5
    $region4: #{tpu_custom_call.1} parent=1 // pred_region
      _
    $region5: #{tpu_custom_call.1} parent=1 // pred_fallthru
      _
    // Predicated region
    $region6: #{tpu_custom_call.1} parent=1 // pred_check
      _
    $region7: #{tpu_custom_call.1} parent=1 // pred_check_branch
      %17 = sbr.rel (0) target = $region9
    $region8: #{tpu_custom_call.1} parent=1 // pred_region
      _
    $region9: #{tpu_custom_call.1} parent=1 // pred_fallthru
      _
    // Predicated region
    $region10: #{tpu_custom_call.1} parent=1 // pred_check
      _
    $region11: #{tpu_custom_call.1} parent=1 // pred_check_branch
      %19 = sbr.rel (0) target = $region13
    $region12: #{tpu_custom_call.1} parent=1 // pred_region
      _
    $region13: #{tpu_custom_call.1} parent=1 // pred_fallthru
      _
    // Predicated region
    $region14: #{tpu_custom_call.1} parent=1 // pred_check
      _
    $region15: #{tpu_custom_call.1} parent=1 // pred_check_branch
      %21 = sbr.rel (0) target = $region17
    $region16: #{tpu_custom_call.1} parent=1 // pred_region
      _
    $region17: #{tpu_custom_call.1} parent=1 // pred_fallthru
      _
    // Predicated region
    $region18: #{tpu_custom_call.1} parent=1 // pred_check
      _
    $region19: #{tpu_custom_call.1} parent=1 // pred_check_branch
      %23 = sbr.rel (0) target = $region21
    $region20: #{tpu_custom_call.1} parent=1 // pred_region
      _
    $region21: #{tpu_custom_call.1} parent=1 // pred_fallthru
      _
    %v24 = vld [vmem:[%s0] sm:$0xff]
    %v25 = vld [vmem:[%s0 + $0x8] sm:$0xff]
    %v26 = vld [vmem:[%s2] sm:$0xff]
    %v27 = vld [vmem:[%s2 + $0x8] sm:$0xff]
    %v28 = vld [vmem:[%s2 + $0x10] sm:$0xff]
    %v29 = vld [vmem:[%s2 + $0x18] sm:$0xff]
    %vm30 = vcmask 261120
    %v32 = vsel %vm30, %v24, 0
    %v35 = vsel %vm30, %v25, 0
    %37 = vmatprep.subr.mxu0 0.0
    %38 = vmatpush1.msra.mxu0 %v26
    %39 = vmatprep.subr.mxu0 0.0
    %40 = vmatpush1.msra.mxu0 %v27
    %41 = vmatprep.subr.mxu0 0.0
    %42 = vmatpush1.msra.mxu0 %v28
    %43 = vmatprep.subr.mxu0 0.0
    %44 = vmatpush1.msra.mxu0 %v29
    %45 = vmatprep.subr.mxu0 0.0
    %46 = vmatpush1.msra.mxu0 0.0
    %47 = vmatprep.subr.mxu0 0.0
    %48 = vmatpush1.msra.mxu0 0.0
    %49 = vmatprep.subr.mxu0 0.0
    %50 = vmatpush1.msra.mxu0 0.0
    %51 = vmatprep.subr.mxu0 0.0
    %52 = vmatpush1.msra.mxu0 0.0
    %53 = vmatprep.subr.mxu0 0.0
    %54 = vmatpush1.msra.mxu0 0.0
    %55 = vmatprep.subr.mxu0 0.0
    %56 = vmatpush1.msra.mxu0 0.0
    %57 = vmatprep.subr.mxu0 0.0
    %58 = vmatpush1.msra.mxu0 0.0
    %59 = vmatprep.subr.mxu0 0.0
    %60 = vmatpush1.msra.mxu0 0.0
    %61 = vmatprep.subr.mxu0 0.0
    %62 = vmatpush1.msra.mxu0 0.0
    %63 = vmatprep.subr.mxu0 0.0
    %64 = vmatpush1.msra.mxu0 0.0
    %65 = vmatprep.subr.mxu0 0.0
    %66 = vmatpush1.msra.mxu0 0.0
    %67 = vmatprep.subr.mxu0 0.0
    %68 = vmatpush1.msra.mxu0 0.0
    %69 = vmatprep.subr.mxu0 0.0
    %70 = vmatpush1.msra.mxu0 0.0
    %71 = vmatprep.subr.mxu0 0.0
    %72 = vmatpush1.msra.mxu0 0.0
    %73 = vmatprep.subr.mxu0 0.0
    %74 = vmatpush1.msra.mxu0 0.0
    %75 = vmatprep.subr.mxu0 0.0
    %76 = vmatpush1.msra.mxu0 0.0
    %77 = vmatprep.subr.mxu0 0.0
    %78 = vmatpush1.msra.mxu0 0.0
    %79 = vmatprep.subr.mxu0 0.0
    %80 = vmatpush1.msra.mxu0 0.0
    %81 = vmatprep.subr.mxu0 0.0
    %82 = vmatpush1.msra.mxu0 0.0
    %83 = vmatprep.subr.mxu0 0.0
    %84 = vmatpush1.msra.mxu0 0.0
    %85 = vmatprep.subr.mxu0 0.0
    %86 = vmatpush1.msra.mxu0 0.0
    %87 = vmatprep.subr.mxu0 0.0
    %88 = vmatpush1.msra.mxu0 0.0
    %89 = vmatprep.subr.mxu0 0.0
    %90 = vmatpush1.msra.mxu0 0.0
    %91 = vmatprep.subr.mxu0 0.0
    %92 = vmatpush1.msra.mxu0 0.0
    %93 = vmatprep.subr.mxu0 0.0
    %94 = vmatpush1.msra.mxu0 0.0
    %95 = vmatprep.subr.mxu0 0.0
    %96 = vmatpush1.msra.mxu0 0.0
    %97 = vmatprep.subr.mxu0 0.0
    %98 = vmatpush1.msra.mxu0 0.0
    %99 = vmatprep.subr.mxu0 0.0
    %100 = vmatpush1.msra.mxu0 0.0
    %101 = vmatprep.mubr.f32.mxu0 0.0
    %102 = vmatmul.mubr.f32.gmra.mrb[0].mxu0 %v32
    %v103 = vpop.f32.mrb[0].mxu0
    %v104 = vadd.f32 0.0, %v103
    %v105 = vpop.f32.mrb[0].mxu0
    %106 = vmatprep.mubr.f32.mxu0 0.0
    %107 = vmatmul.mubr.f32.gmra.mrb[0].mxu0 %v35
    %v108 = vpop.f32.mrb[0].mxu0
    %v109 = vadd.f32 0.0, %v108
    %v110 = vpop.f32.mrb[0].mxu0
    %111 = vdwg.mxu0
    %v112 = vld [vmem:[%s1] sm:$0x3]
    %v113 = vld [vmem:[%s3] sm:$0xff]
    %v114 = vld [vmem:[%s3 + $0x8] sm:$0xff]
    %v115 = vld [vmem:[%s3 + $0x10] sm:$0xff]
    %v116 = vld [vmem:[%s3 + $0x18] sm:$0xff]
    %v117 = vld [vmem:[%s3 + $0x20] sm:$0xff]
    %v118 = vld [vmem:[%s3 + $0x28] sm:$0xff]
    %vm119 = vcmask 392192
    %v121 = vsel %vm119, %v112, 0
    %123 = vmatprep.subr.mxu0 0.0
    %124 = vmatpush1.msra.mxu0 %v113
    %125 = vmatprep.subr.mxu0 0.0
    %126 = vmatpush1.msra.mxu0 %v114
    %127 = vmatprep.subr.mxu0 0.0
    %128 = vmatpush1.msra.mxu0 %v115
    %129 = vmatprep.subr.mxu0 0.0
    %130 = vmatpush1.msra.mxu0 %v116
    %131 = vmatprep.subr.mxu0 0.0
    %132 = vmatpush1.msra.mxu0 %v117
    %133 = vmatprep.subr.mxu0 0.0
    %134 = vmatpush1.msra.mxu0 %v118
    %135 = vmatprep.subr.mxu0 0.0
    %136 = vmatpush1.msra.mxu0 0.0
    %137 = vmatprep.subr.mxu0 0.0
    %138 = vmatpush1.msra.mxu0 0.0
    %139 = vmatprep.subr.mxu0 0.0
    %140 = vmatpush1.msra.mxu0 0.0
    %141 = vmatprep.subr.mxu0 0.0
    %142 = vmatpush1.msra.mxu0 0.0
    %143 = vmatprep.subr.mxu0 0.0
    %144 = vmatpush1.msra.mxu0 0.0
    %145 = vmatprep.subr.mxu0 0.0
    %146 = vmatpush1.msra.mxu0 0.0
    %147 = vmatprep.subr.mxu0 0.0
    %148 = vmatpush1.msra.mxu0 0.0
    %149 = vmatprep.subr.mxu0 0.0
    %150 = vmatpush1.msra.mxu0 0.0
    %151 = vmatprep.subr.mxu0 0.0
    %152 = vmatpush1.msra.mxu0 0.0
    %153 = vmatprep.subr.mxu0 0.0
    %154 = vmatpush1.msra.mxu0 0.0
    %155 = vmatprep.subr.mxu0 0.0
    %156 = vmatpush1.msra.mxu0 0.0
    %157 = vmatprep.subr.mxu0 0.0
    %158 = vmatpush1.msra.mxu0 0.0
    %159 = vmatprep.subr.mxu0 0.0
    %160 = vmatpush1.msra.mxu0 0.0
    %161 = vmatprep.subr.mxu0 0.0
    %162 = vmatpush1.msra.mxu0 0.0
    %163 = vmatprep.subr.mxu0 0.0
    %164 = vmatpush1.msra.mxu0 0.0
    %165 = vmatprep.subr.mxu0 0.0
    %166 = vmatpush1.msra.mxu0 0.0
    %167 = vmatprep.subr.mxu0 0.0
    %168 = vmatpush1.msra.mxu0 0.0
    %169 = vmatprep.subr.mxu0 0.0
    %170 = vmatpush1.msra.mxu0 0.0
    %171 = vmatprep.subr.mxu0 0.0
    %172 = vmatpush1.msra.mxu0 0.0
    %173 = vmatprep.subr.mxu0 0.0
    %174 = vmatpush1.msra.mxu0 0.0
    %175 = vmatprep.subr.mxu0 0.0
    %176 = vmatpush1.msra.mxu0 0.0
    %177 = vmatprep.subr.mxu0 0.0
    %178 = vmatpush1.msra.mxu0 0.0
    %179 = vmatprep.subr.mxu0 0.0
    %180 = vmatpush1.msra.mxu0 0.0
    %181 = vmatprep.subr.mxu0 0.0
    %182 = vmatpush1.msra.mxu0 0.0
    %183 = vmatprep.subr.mxu0 0.0
    %184 = vmatpush1.msra.mxu0 0.0
    %185 = vmatprep.subr.mxu0 0.0
    %186 = vmatpush1.msra.mxu0 0.0
    %187 = vmatprep.mubr.f32.mxu0 0.0
    %188 = vmatmul.mubr.f32.gmra.mrb[0].mxu0 %v121
    %v189 = vpop.f32.mrb[0].mxu0
    %v190 = vadd.f32 0.0, %v189
    %v191 = vpop.f32.mrb[0].mxu0
    %192 = vdwg.mxu0
    %v195 = vunpack.c.l.s4 1966171168
    %v196 = vunpack.c.0.s8 %v195
    %v197 = vlaneseq
    %v198 = vshrl.u32 %v197, 7
    %v199 = vsub.s32 %v196, %v198
    %v200 = vrot.slane %v190, %v199
    %v201 = vcombine.high %v200, %v200
    %v203 = vunpack.c.l.s4 1966171168
    %v204 = vunpack.c.0.s8 %v203
    %v205 = vlaneseq
    %v206 = vshrl.u32 %v205, 7
    %v207 = vsub.s32 %v204, %v206
    %v208 = vrot.slane %v200, %v207
    %v210 = vunpack.c.l.s4 1966171168
    %v211 = vunpack.c.0.s8 %v210
    %v212 = vlaneseq
    %v213 = vshrl.u32 %v212, 7
    %v214 = vsub.s32 %v211, %v213
    %v215 = vrot.slane %v201, %v214
    %v216 = vlaneseq
    %v217 = vshrl.u32 %v216, 7
    %v218 = vsub.s32 0, %v217
    %v219 = vrot.slane %v208, %v218
    %v220 = vlaneseq
    %v221 = vshrl.u32 %v220, 7
    %v222 = vsub.s32 0, %v221
    %v223 = vrot.slane %v215, %v222
    %v226 = vadd.f32 %v104, %v219
    %v227 = vadd.f32 %v109, %v223
    %v228 = vtanh.pop %v226
    %v229 = vtanh.pop %v227
    %v230 = vld [vmem:[%s4] sm:$0x1]
    %v232 = vlaneseq
    %v233 = vshrl.u32 %v232, 7
    %v234 = vsub.s32 0, %v233
    %v235 = vrot.slane %v230, %v234
    %v237 = vmul.f32 %v228, %v235
    %v238 = vmul.f32 %v229, %v235
    %v239 = vsel %vm30, %v237, 0.0
    %240 = vadd.xlane.f32.xlu0 %v239
    %v241 = vpop.xlane.xlu0 %240
    %v242 = vsel %vm30, %v238, 0.0
    %243 = vadd.xlane.f32.xlu0 %v242
    %v244 = vpop.xlane.xlu0 %243
    %v247 = vlaneseq
    %v248 = vand.u32 %v247, 127
    %v249 = vlaneseq
    %v250 = vshrl.u32 %v249, 7
    %v251 = vsub.s32 %v248, %v250
    %v252 = vrot.slane %v241, %v251
    %v253 = vlaneseq
    %v254 = vshrl.u32 %v253, 7
    %v255 = vsub.s32 %v248, %v254
    %v256 = vrot.slane %v244, %v255
    %vm257 = vcmask 1041409
    %v258 = vsel %vm257, %v256, %v252
    %vm260 = vcmask 58368
    %v261 = vsel %vm260, %v258, -inf
    %262 = vmax.xlane.f32.xlu0 %v261
    %v263 = vpop.xlane.xlu0 %262
    %v265 = vlaneseq
    %v266 = vshrl.u32 %v265, 7
    %v267 = vsub.s32 0, %v266
    %v268 = vrot.slane %v263, %v267
    %v269 = vlaneseq
    %v270 = vshrl.u32 %v269, 7
    %v271 = vsub.s32 1, %v270
    %v272 = vrot.slane %v263, %v271
    %v275 = vsub.f32 %v241, %v268
    %v276 = vsub.f32 %v244, %v272
    %v277 = vmul.f32 %v275, 1.442695
    %v278 = vpow.pop %v277
    %v279 = vmul.f32 %v276, 1.442695
    %v280 = vpow.pop %v279
    %283 = vset.pattern.permute.xlu0 0
    %284 = vperm.xlu0 %283, %v278
    %v285 = vpop.permute.xlu0 %284
    %286 = vset.pattern.permute.xlu0 0
    %287 = vperm.xlu0 %286, %v280
    %v288 = vpop.permute.xlu0 %287
    %v289 = vlaneseq
    %v290 = vshrl.u32 %v289, 7
    %v291 = vsub.s32 %v248, %v290
    %v292 = vrot.slane %v285, %v291
    %v293 = vlaneseq
    %v294 = vshrl.u32 %v293, 7
    %v295 = vsub.s32 %v248, %v294
    %v296 = vrot.slane %v288, %v295
    %v297 = vsel %vm257, %v296, %v292
    %v299 = vsel %vm260, %v297, 0.0
    %300 = vadd.xlane.f32.xlu0 %v299
    %v301 = vpop.xlane.xlu0 %300
    %v302 = vrcp.pop %v301
    %v303 = vmul.f32 1.0, %v302
    %v305 = vlaneseq
    %v306 = vshrl.u32 %v305, 7
    %v307 = vsub.s32 0, %v306
    %v308 = vrot.slane %v303, %v307
    %v309 = vlaneseq
    %v310 = vshrl.u32 %v309, 7
    %v311 = vsub.s32 1, %v310
    %v312 = vrot.slane %v303, %v311
    %v315 = vmul.f32 %v278, %v308
    %v316 = vmul.f32 %v280, %v312
    %319 = vset.pattern.permute.xlu0 0
    %320 = vperm.xlu0 %319, %v315
    %v321 = vpop.permute.xlu0 %320
    %322 = vset.pattern.permute.xlu0 0
    %323 = vperm.xlu0 %322, %v316
    %v324 = vpop.permute.xlu0 %323
    %v325 = vlaneseq
    %v326 = vshrl.u32 %v325, 7
    %v327 = vsub.s32 %v248, %v326
    %v328 = vrot.slane %v321, %v327
    %v329 = vlaneseq
    %v330 = vshrl.u32 %v329, 7
    %v331 = vsub.s32 %v248, %v330
    %v332 = vrot.slane %v324, %v331
    %v333 = vsel %vm257, %v332, %v328
    %335 = vst.msk [vmem:[#allocation4] sm:$0x3] %vm260, %v333
    %v338 = vmul.f32 %v321, %v104
    %v339 = vmul.f32 %v324, %v109
    %340 = vst.msk [vmem:[#allocation2] sm:$0xff] %vm30, %v338
    %341 = vst.msk [vmem:[#allocation2 + $0x8] sm:$0xff] %vm30, %v339
    // Predicated region
    $region22: #{tpu_custom_call.1} parent=1 // pred_check
      _
    $region23: #{tpu_custom_call.1} parent=1 // pred_check_branch
      %343 = sbr.rel (0) target = $region25
    $region24: #{tpu_custom_call.1} parent=1 // pred_region
      %s345 = ssub.s32 256, 256
      %346 = vsyncadd [#allocation3], %s345
      %s347 = sshll.u32 [#allocation2], 4
      %s348 = int_to_ptr.vmem [resolvable:$true] %s347
      %353 = dma.vmem_to_hbm [thread:$0]  %s348, 256, %s5, [#allocation3], 128, 128, 8
    $region25: #{tpu_custom_call.1} parent=1 // pred_fallthru
      _
    // Predicated region
    $region26: #{tpu_custom_call.1} parent=1 // pred_check
      _
    $region27: #{tpu_custom_call.1} parent=1 // pred_check_branch
      %355 = sbr.rel (0) target = $region29
    $region28: #{tpu_custom_call.1} parent=1 // pred_region
      %s357 = ssub.s32 32, 32
      %358 = vsyncadd [#allocation5], %s357
      %s360 = sshll.u32 [#allocation4], 4
      %s361 = int_to_ptr.vmem [resolvable:$true] %s360
      %363 = dma.vmem_to_hbm [thread:$0]  %s361, 32, %s6, [#allocation5]
    $region29: #{tpu_custom_call.1} parent=1 // pred_fallthru
      _
    // Predicated region
    $region30: #{tpu_custom_call.1} parent=1 // pred_check
      _
    $region31: #{tpu_custom_call.1} parent=1 // pred_check_branch
      %365 = sbr.rel (0) target = $region33
    $region32: #{tpu_custom_call.1} parent=1 // pred_region
      %366 = dma.done [#allocation3], 256
    $region33: #{tpu_custom_call.1} parent=1 // pred_fallthru
      _
    // Predicated region
    $region34: #{tpu_custom_call.1} parent=1 // pred_check
      _
    $region35: #{tpu_custom_call.1} parent=1 // pred_check_branch
      %368 = sbr.rel (0) target = $region37
    $region36: #{tpu_custom_call.1} parent=1 // pred_region
      %369 = dma.done [#allocation5], 32
    $region37: #{tpu_custom_call.1} parent=1 // pred_fallthru
      _
    %370 = vsyncpa [#allocation3], 1
    %371 = vsyncpa [#allocation5], 1

</llo_original>
